<compile_context>
chip_gen: v6e
topology: v6e:2x2x1
jax: 0.10.0
libtpu: 0.0.40
codegen_flags: <defaults>
</compile_context>

<pallas_src>
import functools

import jax
import jax.numpy as jnp
from jax.experimental import pallas as pl
from jax.experimental.pallas import tpu as pltpu

_PAIRWISE_EPS = 1e-6          # torch.nn.functional.pairwise_distance default eps
_DEFAULT_MARGIN = 2.0

# Conservative VMEM sizing so the same code runs on v5e / v6e / v7x.
_TILE_VMEM_BUDGET = 32 * 1024 * 1024   # 2 inputs x 2 pipeline buffers of (TB, D)
_VMEM_LIMIT_BYTES = 48 * 1024 * 1024
_MAX_TILE_ROWS = 2048                  # >~512 rows already reaches ~85% of HBM roofline


def _choose_tile_rows(batch, feat, itemsize):
    """Largest row-tile s.t. 2 inputs x 2 buffers x (TB, D) fits the VMEM budget."""
    max_rows = _TILE_VMEM_BUDGET // (4 * feat * itemsize)
    max_rows = max(16, (max_rows // 16) * 16)   # multiple of 16 (bf16 sublane packing)
    max_rows = min(max_rows, _MAX_TILE_ROWS)
    if batch <= max_rows:
        return batch                            # full extent: no (8,128) constraint
    return max_rows


def _contrastive_loss_kernel(o1_ref, o2_ref, label_ref, partial_ref,
                             *, batch, tile_rows, steps_per_core, margin):
    c = pl.program_id(0)    # core / partial-sum index ("parallel")
    i = pl.program_id(1)    # reduction step within this core ("arbitrary")

    @pl.when(i == 0)
    def _():
        partial_ref[...] = jnp.zeros_like(partial_ref)

    o1 = o1_ref[...].astype(jnp.float32)            # (TB, D)
    o2 = o2_ref[...].astype(jnp.float32)            # (TB, D)
    label = label_ref[...].astype(jnp.float32)      # (TB, 1)

    # F.pairwise_distance: ||x1 - x2 + eps||_2 per row (eps added to the diff).
    diff = o1 - o2 + _PAIRWISE_EPS
    sq_dist = jnp.sum(diff * diff, axis=-1, keepdims=True)   # (TB, 1)  == d^2
    dist = jnp.sqrt(sq_dist)                                  # (TB, 1)  == d
    hinge = jnp.maximum(margin - dist, 0.0)
    per_example = label * sq_dist + (1.0 - label) * hinge * hinge  # (TB, 1)

    # Mask rows outside the true batch (partial last tile / clamped OOB step).
    block_idx = c * steps_per_core + i
    row = block_idx * tile_rows + jax.lax.broadcasted_iota(
        jnp.int32, per_example.shape, 0)
    per_example = jnp.where(row < batch, per_example, 0.0)

    partial_ref[...] += jnp.sum(per_example)


def contrastive_loss(output1, output2, label, *, margin=_DEFAULT_MARGIN,
                     tile_rows=None):
    """Pallas TPU contrastive loss. output1/output2: (B, D); label: (B,)."""
    batch, feat = output1.shape
    label2d = label.reshape(batch, 1)

    in_itemsize = jnp.dtype(output1.dtype).itemsize
    if tile_rows is None:
        tile_rows = _choose_tile_rows(batch, feat, in_itemsize)
    num_blocks = pl.cdiv(batch, tile_rows)
    ncores = 2 if num_blocks > 1 else 1          # megacore split (v7x); neutral elsewhere
    steps_per_core = pl.cdiv(num_blocks, ncores)

    def in_map(c, i):
        # Clamp so a core's trailing (fully masked) step never DMAs out of bounds.
        blk = jnp.minimum(c * steps_per_core + i, num_blocks - 1)
        return (blk, 0)

    kernel = functools.partial(
        _contrastive_loss_kernel,
        batch=batch, tile_rows=tile_rows,
        steps_per_core=steps_per_core, margin=float(margin))

    cost = pl.CostEstimate(
        flops=4 * batch * feat + 8 * batch,
        transcendentals=batch,                       # one sqrt per row
        bytes_accessed=2 * batch * feat * in_itemsize
        + batch * jnp.dtype(label2d.dtype).itemsize + ncores * 4)

    partials = pl.pallas_call(
        kernel,
        out_shape=jax.ShapeDtypeStruct((ncores, 1, 1), jnp.float32),
        grid_spec=pltpu.PrefetchScalarGridSpec(
            num_scalar_prefetch=0,
            grid=(ncores, steps_per_core),
            in_specs=[
                pl.BlockSpec((tile_rows, feat), in_map),
                pl.BlockSpec((tile_rows, feat), in_map),
                pl.BlockSpec((tile_rows, 1), in_map),
            ],
            out_specs=pl.BlockSpec((1, 1, 1), lambda c, i: (c, 0, 0)),
        ),
        compiler_params=pltpu.CompilerParams(
            dimension_semantics=("parallel", "arbitrary"),
            vmem_limit_bytes=_VMEM_LIMIT_BYTES),
        cost_estimate=cost,
    )(output1, output2, label2d)

    return jnp.sum(partials) / batch


def _reference(output1, output2, label, margin=_DEFAULT_MARGIN):
    # Pure-JAX reference mirroring the PyTorch semantics.
    diff = output1.astype(jnp.float32) - output2.astype(jnp.float32) + _PAIRWISE_EPS
    d = jnp.sqrt(jnp.sum(diff * diff, axis=-1))
    hinge = jnp.maximum(margin - d, 0.0)
    return jnp.mean(label * d**2 + (1.0 - label) * hinge**2)


if __name__ == "__main__":
    key = jax.random.PRNGKey(0)
    k1, k2, k3 = jax.random.split(key, 3)

    # Small shapes consistent with the module: (B, D) embeddings + (B,) labels.
    B, D = 8, 32
    output1 = jax.random.normal(k1, (B, D), dtype=jnp.float32)
    output2 = jax.random.normal(k2, (B, D), dtype=jnp.float32)
    label = jax.random.bernoulli(k3, 0.5, (B,)).astype(jnp.float32)

    loss = jax.block_until_ready(contrastive_loss(output1, output2, label))
    ref = _reference(output1, output2, label)
    assert jnp.allclose(loss, ref, rtol=1e-5, atol=1e-5), (loss, ref)

    # Exercise the tiled / masked / two-partial-sum path at small scale
    # (B not a multiple of the tile, odd number of blocks).
    B2, D2 = 40, 32
    k4, k5, k6 = jax.random.split(k3, 3)
    o1b = jax.random.normal(k4, (B2, D2), dtype=jnp.float32)
    o2b = jax.random.normal(k5, (B2, D2), dtype=jnp.float32)
    lb = jax.random.bernoulli(k6, 0.5, (B2,)).astype(jnp.float32)

    loss2 = jax.block_until_ready(contrastive_loss(o1b, o2b, lb, tile_rows=16))
    ref2 = _reference(o1b, o2b, lb)
    assert jnp.allclose(loss2, ref2, rtol=1e-5, atol=1e-5), (loss2, ref2)

    print("KERNEL_OK")
</pallas_src>

<mosaic_0001>
module attributes {stable_mosaic.version = 11 : i64} {
  func.func @_contrastive_loss_kernel(%arg0: i32, %arg1: i32, %arg2: memref<8x32xf32, #tpu.memory_space<vmem>>, %arg3: memref<8x32xf32, #tpu.memory_space<vmem>>, %arg4: memref<8x1xf32, #tpu.memory_space<vmem>>, %arg5: memref<1x1x1xf32, #tpu.memory_space<vmem>>) attributes {dimension_semantics = [#tpu.dimension_semantics<parallel>, #tpu.dimension_semantics<arbitrary>], iteration_bounds = array<i64: 1, 1>, scalar_prefetch = 0 : i64, scratch_operands = 0 : i64, tpu.core_type = #tpu.core_type<tc>, window_params = [{transform_indices = @transform_0, window_bounds = array<i64: 8, 32>}, {transform_indices = @transform_1, window_bounds = array<i64: 8, 32>}, {transform_indices = @transform_2, window_bounds = array<i64: 8, 1>}, {transform_indices = @transform_3, window_bounds = array<i64: 1, 1, 1>}]} {
    %c0_i32 = arith.constant 0 : i32
    %0 = arith.cmpi eq, %arg1, %c0_i32 : i32
    %1 = arith.extui %0 : i1 to i32
    %c0_i32_0 = arith.constant 0 : i32
    %2 = arith.cmpi ne, %1, %c0_i32_0 : i32
    scf.if %2 {
      %cst_19 = arith.constant 0.000000e+00 : f32
      %41 = vector.broadcast %cst_19 : f32 to vector<1x1x1xf32>
      %c0_20 = arith.constant 0 : index
      %c0_21 = arith.constant 0 : index
      %c0_22 = arith.constant 0 : index
      %42 = vector.load %arg5[%c0_20, %c0_21, %c0_22] : memref<1x1x1xf32, #tpu.memory_space<vmem>>, vector<1x1x1xf32>
      tpu.vector_store %arg5[%c0_20, %c0_21, %c0_22], %41 {strides = array<i32>} : memref<1x1x1xf32, #tpu.memory_space<vmem>>, vector<1x1x1xf32>,
    } else {
    }
    %c0 = arith.constant 0 : index
    %c0_1 = arith.constant 0 : index
    %3 = vector.load %arg2[%c0, %c0_1] : memref<8x32xf32, #tpu.memory_space<vmem>>, vector<8x32xf32>
    %c0_2 = arith.constant 0 : index
    %c0_3 = arith.constant 0 : index
    %4 = vector.load %arg3[%c0_2, %c0_3] : memref<8x32xf32, #tpu.memory_space<vmem>>, vector<8x32xf32>
    %c0_4 = arith.constant 0 : index
    %c0_5 = arith.constant 0 : index
    %5 = vector.load %arg4[%c0_4, %c0_5] : memref<8x1xf32, #tpu.memory_space<vmem>>, vector<8x1xf32>
    %6 = arith.subf %3, %4 : vector<8x32xf32>
    %cst = arith.constant 9.99999997E-7 : f32
    %7 = vector.broadcast %cst : f32 to vector<8x32xf32>
    %8 = arith.addf %6, %7 : vector<8x32xf32>
    %9 = arith.mulf %8, %8 : vector<8x32xf32>
    %cst_6 = arith.constant dense<0.000000e+00> : vector<8xf32>
    %10 = vector.multi_reduction <add>, %9, %cst_6 [1] : vector<8x32xf32> to vector<8xf32>
    %11 = vector.shape_cast %10 : vector<8xf32> to vector<8x1xf32>
    %12 = math.sqrt %11 : vector<8x1xf32>
    %cst_7 = arith.constant 2.000000e+00 : f32
    %13 = vector.broadcast %cst_7 : f32 to vector<8x1xf32>
    %14 = arith.subf %13, %12 : vector<8x1xf32>
    %cst_8 = arith.constant 0.000000e+00 : f32
    %15 = vector.broadcast %cst_8 : f32 to vector<8x1xf32>
    %16 = arith.maximumf %14, %15 : vector<8x1xf32>
    %17 = arith.mulf %5, %11 : vector<8x1xf32>
    %cst_9 = arith.constant 1.000000e+00 : f32
    %18 = vector.broadcast %cst_9 : f32 to vector<8x1xf32>
    %19 = arith.subf %18, %5 : vector<8x1xf32>
    %20 = arith.mulf %19, %16 : vector<8x1xf32>
    %21 = arith.mulf %20, %16 : vector<8x1xf32>
    %22 = arith.addf %17, %21 : vector<8x1xf32>
    %c1_i32 = arith.constant 1 : i32
    %23 = arith.muli %arg0, %c1_i32 : i32
    %24 = arith.addi %23, %arg1 : i32
    %c8_i32 = arith.constant 8 : i32
    %25 = arith.muli %24, %c8_i32 : i32
    %26 = tpu.iota {dimensions = array<i32: 0>} : vector<8x1xi32>
    %27 = vector.broadcast %25 : i32 to vector<8x1xi32>
    %28 = arith.addi %27, %26 : vector<8x1xi32>
    %c8_i32_10 = arith.constant 8 : i32
    %29 = vector.broadcast %c8_i32_10 : i32 to vector<8x1xi32>
    %30 = arith.cmpi slt, %28, %29 : vector<8x1xi32>
    %cst_11 = arith.constant 0.000000e+00 : f32
    %31 = vector.broadcast %cst_11 : f32 to vector<8x1xf32>
    %32 = arith.select %30, %22, %31 : vector<8x1xi1>, vector<8x1xf32>
    %c0_12 = arith.constant 0 : index
    %c0_13 = arith.constant 0 : index
    %c0_14 = arith.constant 0 : index
    %33 = vector.load %arg5[%c0_12, %c0_13, %c0_14] : memref<1x1x1xf32, #tpu.memory_space<vmem>>, vector<1x1x1xf32>
    %34 = vector.shape_cast %32 : vector<8x1xf32> to vector<1x8x1xf32>
    %cst_15 = arith.constant dense<0.000000e+00> : vector<1xf32>
    %35 = vector.multi_reduction <add>, %34, %cst_15 [1, 2] : vector<1x8x1xf32> to vector<1xf32>
    %36 = vector.shape_cast %35 : vector<1xf32> to vector<1x1x1xf32>
    %37 = vector.extract %36[0, 0, 0] : f32 from vector<1x1x1xf32>
    %38 = vector.broadcast %37 : f32 to vector<1x1x1xf32>
    %39 = arith.addf %33, %38 : vector<1x1x1xf32>
    %c0_16 = arith.constant 0 : index
    %c0_17 = arith.constant 0 : index
    %c0_18 = arith.constant 0 : index
    %40 = vector.load %arg5[%c0_16, %c0_17, %c0_18] : memref<1x1x1xf32, #tpu.memory_space<vmem>>, vector<1x1x1xf32>
    tpu.vector_store %arg5[%c0_16, %c0_17, %c0_18], %39 {strides = array<i32>} : memref<1x1x1xf32, #tpu.memory_space<vmem>>, vector<1x1x1xf32>,
    return
  }
  func.func @transform_0(%arg0: i32, %arg1: i32) -> (i32, i32) {
    %c1_i32 = arith.constant 1 : i32
    %0 = arith.muli %arg0, %c1_i32 : i32
    %1 = arith.addi %0, %arg1 : i32
    %c0_i32 = arith.constant 0 : i32
    %2 = arith.minsi %1, %c0_i32 : i32
    %c0_i32_0 = arith.constant 0 : i32
    %c0_i32_1 = arith.constant 0 : i32
    return %2, %c0_i32_0 : i32, i32
  }
  func.func @transform_1(%arg0: i32, %arg1: i32) -> (i32, i32) {
    %c1_i32 = arith.constant 1 : i32
    %0 = arith.muli %arg0, %c1_i32 : i32
    %1 = arith.addi %0, %arg1 : i32
    %c0_i32 = arith.constant 0 : i32
    %2 = arith.minsi %1, %c0_i32 : i32
    %c0_i32_0 = arith.constant 0 : i32
    %c0_i32_1 = arith.constant 0 : i32
    return %2, %c0_i32_0 : i32, i32
  }
  func.func @transform_2(%arg0: i32, %arg1: i32) -> (i32, i32) {
    %c1_i32 = arith.constant 1 : i32
    %0 = arith.muli %arg0, %c1_i32 : i32
    %1 = arith.addi %0, %arg1 : i32
    %c0_i32 = arith.constant 0 : i32
    %2 = arith.minsi %1, %c0_i32 : i32
    %c0_i32_0 = arith.constant 0 : i32
    %c0_i32_1 = arith.constant 0 : i32
    return %2, %c0_i32_0 : i32, i32
  }
  func.func @transform_3(%arg0: i32, %arg1: i32) -> (i32, i32, i32) {
    %c0_i32 = arith.constant 0 : i32
    %c0_i32_0 = arith.constant 0 : i32
    %c0_i32_1 = arith.constant 0 : i32
    return %arg0, %c0_i32, %c0_i32_0 : i32, i32, i32
  }
}

</mosaic_0001>

<llo_original>
// kernel: tpu_custom_call.1
$region0: #{tpu_custom_call.1}
  #allocation0 [shape = 'u32[]', space=smem, size = 0x4, offset = 0x4, fixed_abs, tag = 'smem constant byte address 0x4 - core index']
  #allocation1 [shape = 'u32[144,128]{1,0:T(1,128)}', space=vmem, size = 0x12000, scoped, tag = 'internal scratch']
  %s0 = inlined_call_operand.vmem [shape: f32[8,32], index: 0, kind: input, shape index: {}]
  %s1 = inlined_call_operand.hbm [shape: f32[8,32], index: 1, kind: input, shape index: {}]
  %s2 = inlined_call_operand.vmem [shape: f32[8,1], index: 2, kind: input, shape index: {}]
  %s3 = inlined_call_operand.hbm [shape: f32[1,1,1], index: 3, kind: output, shape index: {}]
  %s4 = sld [smem:[#allocation0]]
  $region30: #{tpu_custom_call.1} parent=0
    _
  %s6 = ssub.s32 1, %s4
  %s7 = scalar_select 0, %s6, %s4
  $region1: #{tpu_custom_call.1} parent=0
    #allocation2 [shape = 'u8[4096]{0}', space=vmem, size = 0x1000, scoped, tag = 'input window, operand 1, single buffered']
    #allocation3 [shape = 's32[1]{0}', space=sflag, size = 0x4, scoped, tag = 'scoped memory for tpu_custom_call.1']
    #allocation4 [shape = 's32[1]{0}', space=sflag, size = 0x4, scoped, tag = 'scoped memory for tpu_custom_call.1']
    #allocation5 [shape = 'u8[512]{0}', space=vmem, size = 0x400, scoped, tag = 'output window, operand 0, single buffered']
    %8 = vsyncpa [#allocation3], 0
    %9 = vsyncpa [#allocation4], 0
    // Predicated region
    $region2: #{tpu_custom_call.1} parent=1 // pred_check
      _
    $region3: #{tpu_custom_call.1} parent=1 // pred_check_branch
      %11 = sbr.rel (0) target = $region5
    $region4: #{tpu_custom_call.1} parent=1 // pred_region
      %s12 = sadd.s32 0, 0
      %p13 = scmp.lt.s32.totalorder %s12, 0
      %s14 = scalar_select %p13, %s12, 0
      %p15 = scmp.lt.s32.totalorder %s14, 0
      %s16 = scalar_select %p15, %s14, 0
      %s17 = smul.addr %s16, 8
      %s18 = scalar_lea.vmem %s0, %s17
      %s19 = sadd.s32 0, 0
      %p20 = scmp.lt.s32.totalorder %s19, 0
      %s21 = scalar_select %p20, %s19, 0
    $region5: #{tpu_custom_call.1} parent=1 // pred_fallthru
      _
    // Predicated region
    $region6: #{tpu_custom_call.1} parent=1 // pred_check
      _
    $region7: #{tpu_custom_call.1} parent=1 // pred_check_branch
      %23 = sbr.rel (0) target = $region9
    $region8: #{tpu_custom_call.1} parent=1 // pred_region
      %s24 = sadd.s32 0, 0
      %p25 = scmp.lt.s32.totalorder %s24, 0
      %s26 = scalar_select %p25, %s24, 0
      %s28 = ssub.s32 128, 128
      %29 = vsyncadd [#allocation3], %s28
      %s30 = smul.addr %s26, 128
      %s31 = scalar_lea.hbm %s1, %s30
      %s33 = sshll.u32 [#allocation2], 4
      %s34 = int_to_ptr.vmem [resolvable:$true] %s33
      %36 = dma.hbm_to_vmem [thread:$0]  %s31, 128, %s34, [#allocation3]
    $region9: #{tpu_custom_call.1} parent=1 // pred_fallthru
      _
    // Predicated region
    $region10: #{tpu_custom_call.1} parent=1 // pred_check
      _
    $region11: #{tpu_custom_call.1} parent=1 // pred_check_branch
      %38 = sbr.rel (0) target = $region13
    $region12: #{tpu_custom_call.1} parent=1 // pred_region
      %s39 = sadd.s32 0, 0
      %p40 = scmp.lt.s32.totalorder %s39, 0
      %s41 = scalar_select %p40, %s39, 0
      %p42 = scmp.lt.s32.totalorder %s41, 0
      %s43 = scalar_select %p42, %s41, 0
      %s44 = smul.addr %s43, 8
      %s45 = scalar_lea.vmem %s2, %s44
      %s46 = sadd.s32 0, 0
      %p47 = scmp.lt.s32.totalorder %s46, 0
      %s48 = scalar_select %p47, %s46, 0
    $region13: #{tpu_custom_call.1} parent=1 // pred_fallthru
      _
    // Predicated region
    $region14: #{tpu_custom_call.1} parent=1 // pred_check
      _
    $region15: #{tpu_custom_call.1} parent=1 // pred_check_branch
      %50 = sbr.rel (0) target = $region17
    $region16: #{tpu_custom_call.1} parent=1 // pred_region
      %51 = dma.done [#allocation3], 128
    $region17: #{tpu_custom_call.1} parent=1 // pred_fallthru
      _
    %s52 = sadd.s32 0, 0
    %p53 = scmp.lt.s32.totalorder %s52, 0
    %s54 = scalar_select %p53, %s52, 0
    %p55 = scmp.lt.s32.totalorder %s54, 0
    %s56 = scalar_select %p55, %s54, 0
    %s57 = smul.addr %s56, 8
    %s58 = scalar_lea.vmem %s0, %s57
    %s59 = sadd.s32 0, 0
    %p60 = scmp.lt.s32.totalorder %s59, 0
    %s61 = scalar_select %p60, %s59, 0
    %p62 = scmp.lt.s32.totalorder %s61, 0
    %s63 = scalar_select %p62, %s61, 0
    %s64 = smul.addr %s63, 8
    %s65 = scalar_lea.vmem %s2, %s64
    %s66 = sadd.s32 0, 0
    %p67 = scmp.lt.s32.totalorder %s66, 0
    %s68 = scalar_select %p67, %s66, 0
    %p69 = scmp.lt.s32.totalorder %s68, 0
    %s70 = scalar_select %p69, %s68, 0
    %s71 = smul.addr %s70, 8
    %s72 = scalar_lea.vmem %s0, %s71
    %s73 = sadd.s32 0, 0
    %p74 = scmp.lt.s32.totalorder %s73, 0
    %s75 = scalar_select %p74, %s73, 0
    %s76 = sadd.s32 0, 0
    %p77 = scmp.lt.s32.totalorder %s76, 0
    %s78 = scalar_select %p77, %s76, 0
    %s79 = sadd.s32 0, 0
    %p80 = scmp.lt.s32.totalorder %s79, 0
    %s81 = scalar_select %p80, %s79, 0
    %p82 = scmp.lt.s32.totalorder %s81, 0
    %s83 = scalar_select %p82, %s81, 0
    %s84 = smul.addr %s83, 8
    %s85 = scalar_lea.vmem %s2, %s84
    %s86 = sadd.s32 0, 0
    %p87 = scmp.lt.s32.totalorder %s86, 0
    %s88 = scalar_select %p87, %s86, 0
    %p89 = scmp.eq.s32.totalorder 0, 0
    // Predicated region
    $region18: #{tpu_custom_call.1} parent=1 // pred_check
      %p90 = pneg %p89
    $region19: #{tpu_custom_call.1} parent=1 // pred_check_branch
      %92 = sbr.rel (%p90) target = $region21
    $region20: #{tpu_custom_call.1} parent=1 // pred_region
      %vm93 = vcmask 0
      %94 = vst.msk [vmem:[#allocation5] sm:$0x1] %vm93, 0.0
    $region21: #{tpu_custom_call.1} parent=1 // pred_fallthru
      _
    %v95 = vld [vmem:[%s72] sm:$0xff]
    %v96 = vld [vmem:[#allocation2] sm:$0xff]
    %v97 = vld [vmem:[%s85] sm:$0xff]
    %v98 = vsub.f32 %v95, %v96
    %v99 = vadd.f32 %v98, 1e-06
    %v100 = vmul.f32 %v99, %v99
    %vm101 = vcmask 261120
    %v102 = vsel %vm101, %v100, 0.0
    %103 = vadd.xlane.f32.xlu0 %v102
    %v104 = vpop.xlane.xlu0 %103
    %v105 = vrsqrt.pop %v104
    %v106 = vmul.f32 %v104, %v105
    %vm107 = vcmp.eq.f32.partialorder %v104, inf
    %v108 = vsel %vm107, %v104, %v106
    %vm109 = vcmp.eq.f32.partialorder %v104, 0.0
    %v110 = vand.u32 %v104, 2147483648
    %v111 = vsel %vm109, %v110, %v108
    %v112 = vsub.f32 2.0, %v111
    %v113 = vmax.f32 %v112, 0.0
    %v114 = vmul.f32 %v97, %v104
    %v115 = vsub.f32 1.0, %v97
    %v116 = vmul.f32 %v115, %v113
    %v117 = vmul.f32 %v116, %v113
    %v118 = vadd.f32 %v114, %v117
    %s119 = sadd.s32 0, 0
    %s120 = smul.u32 %s119, 8
    %v121 = vlaneseq
    %v122 = vshrl.u32 %v121, 7
    %v123 = vstv %s120
    %v124 = vadd.s32 %v123, %v122
    %vm125 = vcmp.lt.s32.totalorder %v124, 8
    %v126 = vsel %vm125, %v118, 0.0
    %v127 = vld [vmem:[#allocation5] sm:$0x1]
    %vm128 = vcmask 7168
    %v129 = vsel %vm128, %v126, 0.0
    %130 = vadd.xlane.f32.xlu0 %v129
    %v131 = vpop.xlane.xlu0 %130
    %v132 = vrot.slane %v131, 4
    %v133 = vadd.f32 %v131, %v132
    %v134 = vrot.slane %v133, 2
    %v135 = vadd.f32 %v133, %v134
    %v136 = vrot.slane %v135, 1
    %v137 = vadd.f32 %v135, %v136
    %s138 = vtos %v137
    %v139 = vstv %s138
    %v140 = vadd.f32 %v127, %v139
    %vm141 = vcmask 0
    %142 = vst.msk [vmem:[#allocation5] sm:$0x1] %vm141, %v140
    // Predicated region
    $region22: #{tpu_custom_call.1} parent=1 // pred_check
      _
    $region23: #{tpu_custom_call.1} parent=1 // pred_check_branch
      %144 = sbr.rel (0) target = $region25
    $region24: #{tpu_custom_call.1} parent=1 // pred_region
      %s146 = ssub.s32 16, 16
      %147 = vsyncadd [#allocation4], %s146
      %s149 = sshll.u32 [#allocation5], 4
      %s150 = int_to_ptr.vmem [resolvable:$true] %s149
      %152 = dma.vmem_to_hbm [thread:$0]  %s150, 16, %s3, [#allocation4]
    $region25: #{tpu_custom_call.1} parent=1 // pred_fallthru
      _
    // Predicated region
    $region26: #{tpu_custom_call.1} parent=1 // pred_check
      _
    $region27: #{tpu_custom_call.1} parent=1 // pred_check_branch
      %154 = sbr.rel (0) target = $region29
    $region28: #{tpu_custom_call.1} parent=1 // pred_region
      %155 = dma.done [#allocation4], 16
    $region29: #{tpu_custom_call.1} parent=1 // pred_fallthru
      _
    %156 = vsyncpa [#allocation3], 1
    %157 = vsyncpa [#allocation4], 1

</llo_original>
